<compile_context>
chip_gen: v7x
topology: tpu7x:2x2x1
jax: 0.10.0
libtpu: 0.0.40
codegen_flags: <defaults>
</compile_context>

<pallas_src>
import functools

import numpy as np
import jax
import jax.numpy as jnp
from jax.experimental import pallas as pl
from jax.experimental.pallas import tpu as pltpu


def _leaky_relu(x, slope=0.2):
  return jnp.where(x >= 0, x, slope * x)


def _features(x_ref, w1_ref, b1_ref, w2_ref):
  """conv1 (1x1, bias) -> LeakyReLU(0.2) -> conv2 (1x1, no bias)."""
  h = jnp.dot(w1_ref[...], x_ref[...], preferred_element_type=jnp.float32)
  h = _leaky_relu(h + b1_ref[...])                 # b1 broadcasts over lanes
  return jnp.dot(w2_ref[...], h, preferred_element_type=jnp.float32)


# ----------------------------------------------------------------------------
# Stage 1: per-tile partial BatchNorm statistics of conv2's output.
# ----------------------------------------------------------------------------
def stage1_kernel(x_ref, w1_ref, b1_ref, w2_ref, sum_ref, m2_ref, *, hw):
  i = pl.program_id(1)
  tm = x_ref.shape[-1]
  z = _features(x_ref, w1_ref, b1_ref, w2_ref)     # (ndf2, tm), pixels on lanes

  lane = jax.lax.broadcasted_iota(jnp.int32, (1, tm), 1)
  valid = (i * tm + lane) < hw                     # mask the (possible) tail tile
  cnt = jnp.minimum(hw - i * tm, tm).astype(jnp.float32)

  s = jnp.sum(jnp.where(valid, z, 0.0), axis=1, keepdims=True)    # (ndf2, 1)
  mean = s / cnt
  d = jnp.where(valid, z - mean, 0.0)
  sum_ref[...] = s
  m2_ref[...] = jnp.sum(d * d, axis=1, keepdims=True)


# ----------------------------------------------------------------------------
# Stage 2: recompute features, apply BN affine + LeakyReLU + conv3.
# ----------------------------------------------------------------------------
def stage2_kernel(x_ref, w1_ref, b1_ref, w2_ref, scale_ref, shift_ref, w3_ref,
                  out_ref):
  z = _features(x_ref, w1_ref, b1_ref, w2_ref)     # (ndf2, tm)
  y = _leaky_relu(z * scale_ref[...] + shift_ref[...])
  out_ref[...] = jnp.dot(w3_ref[...], y, preferred_element_type=jnp.float32)


# ----------------------------------------------------------------------------
# Wrapper
# ----------------------------------------------------------------------------
def pixel_discriminator(x_nchw, params, *, tm=4096, eps=1e-5):
  """Forward pass. x_nchw: (N, C, H, W) float32."""
  w1, b1, w2, gamma, beta, w3 = (params["w1"], params["b1"], params["w2"],
                                 params["gamma"], params["beta"], params["w3"])
  N, C, H, W = x_nchw.shape
  HW = H * W
  M = N * HW
  ndf = w1.shape[0]
  ndf2 = w2.shape[0]

  # Free reshape only -- no NCHW -> NHWC transpose on either side.
  x = x_nchw.reshape(N, C, HW).astype(jnp.float32)
  b1c = b1.reshape(ndf, 1).astype(jnp.float32)
  w3r = w3.reshape(1, ndf2).astype(jnp.float32)

  # Pixel-axis (lane) tile.  Large tiles amortize per-grid-step overhead;
  # VMEM transients stay a few MiB even at tm=4096 (safe on v5e/v6e/v7x).
  if HW <= tm:
    tm_eff = HW
  else:
    tm_eff = tm
    assert tm_eff % 128 == 0, "tile size must be a multiple of 128 lanes"
  n_tiles = pl.cdiv(HW, tm_eff)
  grid = (N, n_tiles)

  compiler_params = pltpu.CompilerParams(
      dimension_semantics=("parallel", "parallel"),
      vmem_limit_bytes=48 * 1024 * 1024)

  x_spec = pl.BlockSpec((None, C, tm_eff), lambda n, i: (n, 0, i))
  w1_spec = pl.BlockSpec((ndf, C), lambda n, i: (0, 0))
  b1_spec = pl.BlockSpec((ndf, 1), lambda n, i: (0, 0))
  w2_spec = pl.BlockSpec((ndf2, ndf), lambda n, i: (0, 0))
  col_spec = pl.BlockSpec((ndf2, 1), lambda n, i: (0, 0))
  stat_spec = pl.BlockSpec((None, None, ndf2, 1), lambda n, i: (n, i, 0, 0))

  mm_flops = 2 * M * (C * ndf + ndf * ndf2)

  # ---- stage 1: per-tile partial BatchNorm statistics ---------------------
  cost1 = pl.CostEstimate(
      flops=mm_flops + 6 * M * ndf2,
      transcendentals=0,
      bytes_accessed=4 * (M * C + 2 * N * n_tiles * ndf2
                          + ndf * C + ndf + ndf2 * ndf))
  sums, m2s = pl.pallas_call(
      functools.partial(stage1_kernel, hw=HW),
      out_shape=(
          jax.ShapeDtypeStruct((N, n_tiles, ndf2, 1), jnp.float32),
          jax.ShapeDtypeStruct((N, n_tiles, ndf2, 1), jnp.float32),
      ),
      grid_spec=pltpu.PrefetchScalarGridSpec(
          num_scalar_prefetch=0,
          grid=grid,
          in_specs=[x_spec, w1_spec, b1_spec, w2_spec],
          out_specs=[stat_spec, stat_spec],
      ),
      compiler_params=compiler_params,
      cost_estimate=cost1,
  )(x, w1, b1c, w2)

  # ---- glue: combine chunked stats (Chan et al.) -> BN affine --------------
  counts = np.minimum(tm_eff, HW - np.arange(n_tiles) * tm_eff)
  counts = jnp.asarray(counts, jnp.float32)[None, :, None, None]
  total = float(M)
  mean = jnp.sum(sums, axis=(0, 1)) / total                      # (ndf2, 1)
  tile_mean = sums / counts
  m2 = jnp.sum(m2s, axis=(0, 1)) + jnp.sum(
      counts * (tile_mean - mean) ** 2, axis=(0, 1))
  var = m2 / total                       # biased variance (BN training mode)
  inv_std = jax.lax.rsqrt(var + eps)
  scale = gamma.reshape(ndf2, 1).astype(jnp.float32) * inv_std   # (ndf2, 1)
  shift = beta.reshape(ndf2, 1).astype(jnp.float32) - mean * scale

  # ---- stage 2: BN affine + LeakyReLU + conv3 (lane-dense logits) ----------
  cost2 = pl.CostEstimate(
      flops=mm_flops + 2 * M * ndf2 + 4 * M * ndf2,
      transcendentals=0,
      bytes_accessed=4 * (M * C + M + ndf * C + ndf + ndf2 * ndf + 3 * ndf2))
  out = pl.pallas_call(
      stage2_kernel,
      out_shape=jax.ShapeDtypeStruct((N, 1, HW), jnp.float32),
      grid_spec=pltpu.PrefetchScalarGridSpec(
          num_scalar_prefetch=0,
          grid=grid,
          in_specs=[x_spec, w1_spec, b1_spec, w2_spec, col_spec, col_spec,
                    pl.BlockSpec((1, ndf2), lambda n, i: (0, 0))],
          out_specs=pl.BlockSpec((None, 1, tm_eff), lambda n, i: (n, 0, i)),
      ),
      compiler_params=compiler_params,
      cost_estimate=cost2,
  )(x, w1, b1c, w2, scale, shift, w3r)

  # (N, 1, H*W) -> (N, 1, H, W): free reshape, no transpose.
  return out.reshape(N, 1, H, W)


# ----------------------------------------------------------------------------
# Deterministic parameter construction (synthetic; matches module shapes).
# ----------------------------------------------------------------------------
def make_params(key, input_nc, ndf):
  k1, k2, k3, k4 = jax.random.split(key, 4)
  # Conv 1x1 weights in PyTorch (out_channels, in_channels) orientation.
  w1 = 0.1 * jax.random.normal(k1, (ndf, input_nc), jnp.float32)
  b1 = 0.1 * jax.random.normal(k4, (ndf,), jnp.float32)
  w2 = 0.1 * jax.random.normal(k2, (2 * ndf, ndf), jnp.float32)
  w3 = 0.1 * jax.random.normal(k3, (1, 2 * ndf), jnp.float32)
  # BatchNorm2d affine params (PyTorch default init: gamma=1, beta=0).
  gamma = jnp.ones((2 * ndf,), jnp.float32)
  beta = jnp.zeros((2 * ndf,), jnp.float32)
  return dict(w1=w1, b1=b1, w2=w2, gamma=gamma, beta=beta, w3=w3)


# ----------------------------------------------------------------------------
# Pure-JAX reference (PyTorch BatchNorm2d training-mode semantics).
# ----------------------------------------------------------------------------
def reference(x_nchw, params, eps=1e-5):
  w1, b1, w2, gamma, beta, w3 = (params["w1"], params["b1"], params["w2"],
                                 params["gamma"], params["beta"], params["w3"])
  N, C, H, W = x_nchw.shape
  x = x_nchw.reshape(N, C, H * W).astype(jnp.float32)
  h = _leaky_relu(jnp.einsum("oc,ncm->nom", w1, x) + b1[None, :, None])
  z = jnp.einsum("oc,ncm->nom", w2, h)
  mean = jnp.mean(z, axis=(0, 2), keepdims=True)
  var = jnp.mean((z - mean) ** 2, axis=(0, 2), keepdims=True)
  zn = ((z - mean) * jax.lax.rsqrt(var + eps) * gamma[None, :, None]
        + beta[None, :, None])
  y = _leaky_relu(zn)
  out = jnp.einsum("oc,ncm->nom", w3, y)
  return out.reshape(N, 1, H, W)


if __name__ == "__main__":
  input_nc, ndf = 4, 64
  N, H, W = 2, 16, 16

  key = jax.random.PRNGKey(0)
  kx, kp = jax.random.split(key)
  x = jax.random.normal(kx, (N, input_nc, H, W), jnp.float32)
  params = make_params(kp, input_nc, ndf)

  out = jax.block_until_ready(pixel_discriminator(x, params))
  ref = jax.block_until_ready(reference(x, params))

  assert out.shape == (N, 1, H, W), out.shape
  max_err = float(jnp.max(jnp.abs(out - ref)))
  assert jnp.allclose(out, ref, rtol=2e-3, atol=2e-3), max_err
  print("KERNEL_OK")
</pallas_src>

<mosaic_0001>
module attributes {stable_mosaic.version = 11 : i64} {
  func.func @stage1_kernel(%arg0: i32, %arg1: i32, %arg2: memref<1x4x256xf32, #tpu.memory_space<vmem>>, %arg3: memref<64x4xf32, #tpu.memory_space<vmem>>, %arg4: memref<64x1xf32, #tpu.memory_space<vmem>>, %arg5: memref<128x64xf32, #tpu.memory_space<vmem>>, %arg6: memref<1x1x128x1xf32, #tpu.memory_space<vmem>>, %arg7: memref<1x1x128x1xf32, #tpu.memory_space<vmem>>) attributes {dimension_semantics = [#tpu.dimension_semantics<parallel>, #tpu.dimension_semantics<parallel>], iteration_bounds = array<i64: 2, 1>, scalar_prefetch = 0 : i64, scratch_operands = 0 : i64, tpu.core_type = #tpu.core_type<tc>, window_params = [{transform_indices = @transform_0, window_bounds = array<i64: 1, 4, 256>}, {pipeline_mode = #tpu.pipeline_mode<synchronous>, transform_indices = @transform_1, window_bounds = array<i64: 64, 4>}, {pipeline_mode = #tpu.pipeline_mode<synchronous>, transform_indices = @transform_2, window_bounds = array<i64: 64, 1>}, {pipeline_mode = #tpu.pipeline_mode<synchronous>, transform_indices = @transform_3, window_bounds = array<i64: 128, 64>}, {transform_indices = @transform_4, window_bounds = array<i64: 1, 1, 128, 1>}, {transform_indices = @transform_5, window_bounds = array<i64: 1, 1, 128, 1>}]} {
    %c0 = arith.constant 0 : index
    %c0_0 = arith.constant 0 : index
    %0 = vector.load %arg3[%c0, %c0_0] : memref<64x4xf32, #tpu.memory_space<vmem>>, vector<64x4xf32>
    %c0_1 = arith.constant 0 : index
    %c0_2 = arith.constant 0 : index
    %c0_3 = arith.constant 0 : index
    %1 = vector.load %arg2[%c0_1, %c0_2, %c0_3] : memref<1x4x256xf32, #tpu.memory_space<vmem>>, vector<1x4x256xf32>
    %2 = vector.shape_cast %1 : vector<1x4x256xf32> to vector<4x256xf32>
    %cst = arith.constant dense<0.000000e+00> : vector<64x256xf32>
    %3 = tpu.matmul %0, %2, %cst {dimension_numbers = #tpu.dot_dimension_numbers<[1], [0], [0], [1], [0, 0, 1, 1], [], []>} : vector<64x4xf32>, vector<4x256xf32>, vector<64x256xf32> -> vector<64x256xf32>
    %c0_4 = arith.constant 0 : index
    %c0_5 = arith.constant 0 : index
    %4 = vector.load %arg4[%c0_4, %c0_5] : memref<64x1xf32, #tpu.memory_space<vmem>>, vector<64x1xf32>
    %5 = vector.broadcast %4 : vector<64x1xf32> to vector<64x256xf32>
    %6 = arith.addf %3, %5 : vector<64x256xf32>
    %cst_6 = arith.constant 0.000000e+00 : f32
    %7 = vector.broadcast %cst_6 : f32 to vector<64x256xf32>
    %8 = arith.cmpf oge, %6, %7 : vector<64x256xf32>
    %cst_7 = arith.constant 2.000000e-01 : f32
    %9 = vector.broadcast %cst_7 : f32 to vector<64x256xf32>
    %10 = arith.mulf %9, %6 : vector<64x256xf32>
    %11 = arith.select %8, %6, %10 : vector<64x256xi1>, vector<64x256xf32>
    %c0_8 = arith.constant 0 : index
    %c0_9 = arith.constant 0 : index
    %12 = vector.load %arg5[%c0_8, %c0_9] : memref<128x64xf32, #tpu.memory_space<vmem>>, vector<128x64xf32>
    %cst_10 = arith.constant dense<0.000000e+00> : vector<128x256xf32>
    %13 = tpu.matmul %12, %11, %cst_10 {dimension_numbers = #tpu.dot_dimension_numbers<[1], [0], [0], [1], [0, 0, 1, 1], [], []>} : vector<128x64xf32>, vector<64x256xf32>, vector<128x256xf32> -> vector<128x256xf32>
    %14 = tpu.iota {dimensions = array<i32: 1>} : vector<1x256xi32>
    %c256_i32 = arith.constant 256 : i32
    %15 = arith.muli %arg1, %c256_i32 : i32
    %16 = vector.broadcast %15 : i32 to vector<1x256xi32>
    %17 = arith.addi %16, %14 : vector<1x256xi32>
    %c256_i32_11 = arith.constant 256 : i32
    %18 = vector.broadcast %c256_i32_11 : i32 to vector<1x256xi32>
    %19 = arith.cmpi slt, %17, %18 : vector<1x256xi32>
    %c256_i32_12 = arith.constant 256 : i32
    %20 = arith.muli %arg1, %c256_i32_12 : i32
    %c256_i32_13 = arith.constant 256 : i32
    %21 = arith.subi %c256_i32_13, %20 : i32
    %c256_i32_14 = arith.constant 256 : i32
    %22 = arith.minsi %21, %c256_i32_14 : i32
    %23 = arith.sitofp %22 : i32 to f32
    %cst_15 = arith.constant 0.000000e+00 : f32
    %24 = vector.shape_cast %19 : vector<1x256xi1> to vector<1x256xi1>
    %25 = vector.broadcast %24 : vector<1x256xi1> to vector<128x256xi1>
    %26 = vector.broadcast %cst_15 : f32 to vector<128x256xf32>
    %27 = arith.select %25, %13, %26 : vector<128x256xi1>, vector<128x256xf32>
    %cst_16 = arith.constant dense<0.000000e+00> : vector<128xf32>
    %28 = vector.multi_reduction <add>, %27, %cst_16 [1] : vector<128x256xf32> to vector<128xf32>
    %29 = vector.shape_cast %28 : vector<128xf32> to vector<128x1xf32>
    %30 = vector.broadcast %23 : f32 to vector<128x1xf32>
    %31 = arith.divf %29, %30 : vector<128x1xf32>
    %32 = vector.broadcast %31 : vector<128x1xf32> to vector<128x256xf32>
    %33 = arith.subf %13, %32 : vector<128x256xf32>
    %cst_17 = arith.constant 0.000000e+00 : f32
    %34 = vector.shape_cast %19 : vector<1x256xi1> to vector<1x256xi1>
    %35 = vector.broadcast %34 : vector<1x256xi1> to vector<128x256xi1>
    %36 = vector.broadcast %cst_17 : f32 to vector<128x256xf32>
    %37 = arith.select %35, %33, %36 : vector<128x256xi1>, vector<128x256xf32>
    %c0_18 = arith.constant 0 : index
    %c0_19 = arith.constant 0 : index
    %c0_20 = arith.constant 0 : index
    %c0_21 = arith.constant 0 : index
    %38 = vector.load %arg6[%c0_18, %c0_19, %c0_20, %c0_21] : memref<1x1x128x1xf32, #tpu.memory_space<vmem>>, vector<1x1x128x1xf32>
    %39 = vector.shape_cast %38 : vector<1x1x128x1xf32> to vector<128x1xf32>
    %40 = vector.shape_cast %29 : vector<128x1xf32> to vector<1x1x128x1xf32>
    tpu.vector_store %arg6[%c0_18, %c0_19, %c0_20, %c0_21], %40 {strides = array<i32>} : memref<1x1x128x1xf32, #tpu.memory_space<vmem>>, vector<1x1x128x1xf32>,
    %41 = arith.mulf %37, %37 : vector<128x256xf32>
    %cst_22 = arith.constant dense<0.000000e+00> : vector<128xf32>
    %42 = vector.multi_reduction <add>, %41, %cst_22 [1] : vector<128x256xf32> to vector<128xf32>
    %43 = vector.shape_cast %42 : vector<128xf32> to vector<128x1xf32>
    %c0_23 = arith.constant 0 : index
    %c0_24 = arith.constant 0 : index
    %c0_25 = arith.constant 0 : index
    %c0_26 = arith.constant 0 : index
    %44 = vector.load %arg7[%c0_23, %c0_24, %c0_25, %c0_26] : memref<1x1x128x1xf32, #tpu.memory_space<vmem>>, vector<1x1x128x1xf32>
    %45 = vector.shape_cast %44 : vector<1x1x128x1xf32> to vector<128x1xf32>
    %46 = vector.shape_cast %43 : vector<128x1xf32> to vector<1x1x128x1xf32>
    tpu.vector_store %arg7[%c0_23, %c0_24, %c0_25, %c0_26], %46 {strides = array<i32>} : memref<1x1x128x1xf32, #tpu.memory_space<vmem>>, vector<1x1x128x1xf32>,
    return
  }
  func.func @transform_0(%arg0: i32, %arg1: i32) -> (i32, i32, i32) {
    %c0_i32 = arith.constant 0 : i32
    %c0_i32_0 = arith.constant 0 : i32
    return %arg0, %c0_i32, %arg1 : i32, i32, i32
  }
  func.func @transform_1(%arg0: i32, %arg1: i32) -> (i32, i32) {
    %c0_i32 = arith.constant 0 : i32
    %c0_i32_0 = arith.constant 0 : i32
    %c0_i32_1 = arith.constant 0 : i32
    return %c0_i32, %c0_i32_0 : i32, i32
  }
  func.func @transform_2(%arg0: i32, %arg1: i32) -> (i32, i32) {
    %c0_i32 = arith.constant 0 : i32
    %c0_i32_0 = arith.constant 0 : i32
    %c0_i32_1 = arith.constant 0 : i32
    return %c0_i32, %c0_i32_0 : i32, i32
  }
  func.func @transform_3(%arg0: i32, %arg1: i32) -> (i32, i32) {
    %c0_i32 = arith.constant 0 : i32
    %c0_i32_0 = arith.constant 0 : i32
    %c0_i32_1 = arith.constant 0 : i32
    return %c0_i32, %c0_i32_0 : i32, i32
  }
  func.func @transform_4(%arg0: i32, %arg1: i32) -> (i32, i32, i32, i32) {
    %c0_i32 = arith.constant 0 : i32
    %c0_i32_0 = arith.constant 0 : i32
    %c0_i32_1 = arith.constant 0 : i32
    return %arg0, %arg1, %c0_i32, %c0_i32_0 : i32, i32, i32, i32
  }
  func.func @transform_5(%arg0: i32, %arg1: i32) -> (i32, i32, i32, i32) {
    %c0_i32 = arith.constant 0 : i32
    %c0_i32_0 = arith.constant 0 : i32
    %c0_i32_1 = arith.constant 0 : i32
    return %arg0, %arg1, %c0_i32, %c0_i32_0 : i32, i32, i32, i32
  }
}

</mosaic_0001>

<llo_original>
// kernel: tpu_custom_call.1
$region0: #{tpu_custom_call.1}
  #allocation0 [shape = 'u32[]', space=smem, size = 0x4, offset = 0x4, fixed_abs, tag = 'smem constant byte address 0x4 - core index']
  #allocation1 [shape = 'u32[144,128]{1,0:T(1,128)}', space=vmem, size = 0x12000, scoped, tag = 'internal scratch']
  %s0 = inlined_call_operand.vmem [shape: f32[2,4,256], index: 0, kind: input, shape index: {}]
  %s1 = inlined_call_operand.vmem [shape: f32[64,4], index: 1, kind: input, shape index: {}]
  %s2 = inlined_call_operand.vmem [shape: f32[64,1], index: 2, kind: input, shape index: {}]
  %s3 = inlined_call_operand.vmem [shape: f32[128,64], index: 3, kind: input, shape index: {}]
  %s4 = inlined_call_operand.vmem [shape: f32[2,1,128,1], index: 4, kind: output, shape index: {0}]
  %s5 = inlined_call_operand.vmem [shape: f32[2,1,128,1], index: 5, kind: output, shape index: {1}]
  %6 = xla_tuple %s4, %s5
  %s7 = sld [smem:[#allocation0]]
  $region57: #{tpu_custom_call.1} parent=0
    _
  %s9 = ssub.s32 1, %s7
  %s10 = scalar_select 0, %s9, %s7
  loop: start=0, step=1, limit=4
  $region2: #{tpu_custom_call.1} parent=0 // loop_pre_header
    _
  $region3: #{tpu_custom_call.1} parent=0 // loop_header
    %s12 = sphi 0, %s16
    %p13 = scmp.ge.s32.totalorder %s12, 4
    %s19 = sphi 0, %s31
    %s20 = sphi 0, %s27
    %s21 = sphi 0, %s19
    %s22 = sphi 0, %s20
    %s23 = sphi 0, %s21
    %s24 = sphi 0, %s22
    %s36 = sphi 0, %s38
    %s39 = sphi 0, %s36
    %s40 = sphi 0, %s39
    %s56 = sphi 0, %s40
    %s60 = sphi 0, %s60
    %s62 = sphi 0, %s60
    %s63 = sphi 0, %s62
    %s77 = sphi 0, %s63
    %s81 = sphi 0, %s81
    %s83 = sphi 0, %s81
    %s84 = sphi 0, %s83
    %s98 = sphi 0, %s84
    %s102 = sphi 0, %s102
    %s104 = sphi 0, %s102
    %s105 = sphi 0, %s104
    %s119 = sphi 0, %s105
    %s127 = sphi 0, %s129
    %s130 = sphi 0, %s127
    %s131 = sphi 0, %s130
    %s147 = sphi 0, %s131
    %s155 = sphi 0, %s157
    %s158 = sphi 0, %s155
    %s159 = sphi 0, %s158
    %s175 = sphi 0, %s159
  $region4: #{tpu_custom_call.1} parent=0 // loop_header_branch
    %15 = sbr.rel (%p13) target = $region8
  $region5: #{tpu_custom_call.1} parent=0 // loop_body
    %s17 = ssub.s32 %s12, 1
    %s18 = ssub.s32 %s12, 2
    %s25 = sadd.s32 1, %s20
    %p26 = scmp.ge.s32.totalorder %s25, 1
    %s27 = scalar_select %p26, 0, %s25
    %s28 = sadd.s32 1, %s19
    %s29 = scalar_select %p26, %s28, %s19
    %p30 = scmp.ge.s32.totalorder %s29, 2
    %s31 = scalar_select %p30, 0, %s29
    %s32 = ssub.s32 %s19, %s31
    %s33 = ssub.s32 %s20, %s27
    %s34 = sor.u32 %s32, %s33
    %p35 = scmp.eq.s32.totalorder %s34, 0
    %s37 = sadd.s32 %s36, 1
    %s38 = scalar_select %p35, %s36, %s37
    %p41 = pneg %p35
    %p42 = scmp.eq.s32.totalorder %s12, 1
    %p43 = por %p41, %p42
    %p44 = scmp.ne.s32.totalorder %s36, %s39
    %p45 = scmp.eq.s32.totalorder %s12, 0
    %p46 = por %p44, %p45
    %p47 = scmp.ne.s32.totalorder %s36, %s39
    %p48 = scmp.eq.s32.totalorder %s17, 1
    %p49 = por %p47, %p48
    %p50 = scmp.ne.s32.totalorder %s39, %s40
    %p51 = scmp.eq.s32.totalorder %s17, 0
    %p52 = por %p50, %p51
    %p53 = scmp.ne.s32.totalorder %s39, %s40
    %p54 = scmp.eq.s32.totalorder %s18, 1
    %p55 = por %p53, %p54
    %p57 = scmp.ne.s32.totalorder %s40, %s56
    %p58 = scmp.eq.s32.totalorder %s18, 0
    %p59 = por %p57, %p58
    %s61 = sadd.s32 %s60, 1
    %p64 = scmp.eq.s32.totalorder %s12, 1
    %p65 = scmp.ne.s32.totalorder %s60, %s62
    %p66 = scmp.eq.s32.totalorder %s12, 0
    %p67 = por %p65, %p66
    %p68 = scmp.ne.s32.totalorder %s60, %s62
    %p69 = scmp.eq.s32.totalorder %s17, 1
    %p70 = por %p68, %p69
    %p71 = scmp.ne.s32.totalorder %s62, %s63
    %p72 = scmp.eq.s32.totalorder %s17, 0
    %p73 = por %p71, %p72
    %p74 = scmp.ne.s32.totalorder %s62, %s63
    %p75 = scmp.eq.s32.totalorder %s18, 1
    %p76 = por %p74, %p75
    %p78 = scmp.ne.s32.totalorder %s63, %s77
    %p79 = scmp.eq.s32.totalorder %s18, 0
    %p80 = por %p78, %p79
    %s82 = sadd.s32 %s81, 1
    %p85 = scmp.eq.s32.totalorder %s12, 1
    %p86 = scmp.ne.s32.totalorder %s81, %s83
    %p87 = scmp.eq.s32.totalorder %s12, 0
    %p88 = por %p86, %p87
    %p89 = scmp.ne.s32.totalorder %s81, %s83
    %p90 = scmp.eq.s32.totalorder %s17, 1
    %p91 = por %p89, %p90
    %p92 = scmp.ne.s32.totalorder %s83, %s84
    %p93 = scmp.eq.s32.totalorder %s17, 0
    %p94 = por %p92, %p93
    %p95 = scmp.ne.s32.totalorder %s83, %s84
    %p96 = scmp.eq.s32.totalorder %s18, 1
    %p97 = por %p95, %p96
    %p99 = scmp.ne.s32.totalorder %s84, %s98
    %p100 = scmp.eq.s32.totalorder %s18, 0
    %p101 = por %p99, %p100
    %s103 = sadd.s32 %s102, 1
    %p106 = scmp.eq.s32.totalorder %s12, 1
    %p107 = scmp.ne.s32.totalorder %s102, %s104
    %p108 = scmp.eq.s32.totalorder %s12, 0
    %p109 = por %p107, %p108
    %p110 = scmp.ne.s32.totalorder %s102, %s104
    %p111 = scmp.eq.s32.totalorder %s17, 1
    %p112 = por %p110, %p111
    %p113 = scmp.ne.s32.totalorder %s104, %s105
    %p114 = scmp.eq.s32.totalorder %s17, 0
    %p115 = por %p113, %p114
    %p116 = scmp.ne.s32.totalorder %s104, %s105
    %p117 = scmp.eq.s32.totalorder %s18, 1
    %p118 = por %p116, %p117
    %p120 = scmp.ne.s32.totalorder %s105, %s119
    %p121 = scmp.eq.s32.totalorder %s18, 0
    %p122 = por %p120, %p121
    %s123 = ssub.s32 %s19, %s31
    %s124 = ssub.s32 %s20, %s27
    %s125 = sor.u32 %s123, %s124
    %p126 = scmp.eq.s32.totalorder %s125, 0
    %s128 = sadd.s32 %s127, 1
    %s129 = scalar_select %p126, %s127, %s128
    %p132 = pneg %p126
    %p133 = scmp.eq.s32.totalorder %s12, 1
    %p134 = por %p132, %p133
    %p135 = scmp.ne.s32.totalorder %s127, %s130
    %p136 = scmp.eq.s32.totalorder %s12, 0
    %p137 = por %p135, %p136
    %p138 = scmp.ne.s32.totalorder %s127, %s130
    %p139 = scmp.eq.s32.totalorder %s17, 1
    %p140 = por %p138, %p139
    %p141 = scmp.ne.s32.totalorder %s130, %s131
    %p142 = scmp.eq.s32.totalorder %s17, 0
    %p143 = por %p141, %p142
    %p144 = scmp.ne.s32.totalorder %s130, %s131
    %p145 = scmp.eq.s32.totalorder %s18, 1
    %p146 = por %p144, %p145
    %p148 = scmp.ne.s32.totalorder %s131, %s147
    %p149 = scmp.eq.s32.totalorder %s18, 0
    %p150 = por %p148, %p149
    %s151 = ssub.s32 %s19, %s31
    %s152 = ssub.s32 %s20, %s27
    %s153 = sor.u32 %s151, %s152
    %p154 = scmp.eq.s32.totalorder %s153, 0
    %s156 = sadd.s32 %s155, 1
    %s157 = scalar_select %p154, %s155, %s156
    %p160 = pneg %p154
    %p161 = scmp.eq.s32.totalorder %s12, 1
    %p162 = por %p160, %p161
    %p163 = scmp.ne.s32.totalorder %s155, %s158
    %p164 = scmp.eq.s32.totalorder %s12, 0
    %p165 = por %p163, %p164
    %p166 = scmp.ne.s32.totalorder %s155, %s158
    %p167 = scmp.eq.s32.totalorder %s17, 1
    %p168 = por %p166, %p167
    %p169 = scmp.ne.s32.totalorder %s158, %s159
    %p170 = scmp.eq.s32.totalorder %s17, 0
    %p171 = por %p169, %p170
    %p172 = scmp.ne.s32.totalorder %s158, %s159
    %p173 = scmp.eq.s32.totalorder %s18, 1
    %p174 = por %p172, %p173
    %p176 = scmp.ne.s32.totalorder %s159, %s175
    %p177 = scmp.eq.s32.totalorder %s18, 0
    %p178 = por %p176, %p177
    %p179 = scmp.le.s32.totalorder 1, %s12
    %p180 = scmp.lt.s32.totalorder %s12, 3
    %p181 = pnand %p179, %p180
    %p182 = pneg %p181
    // Predicated region
    $region9: #{tpu_custom_call.1} parent=5 // pred_check
      _
    $region10: #{tpu_custom_call.1} parent=5 // pred_check_branch
      %184 = sbr.rel (%p181) target = $region12
    $region11: #{tpu_custom_call.1} parent=5 // pred_region
      %s185 = ssub.s32 %s12, 1
      // Predicated region
      $region13: #{tpu_custom_call.1} parent=11 // pred_check
        %p186 = pneg %p73
      $region14: #{tpu_custom_call.1} parent=11 // pred_check_branch
        %188 = sbr.rel (%p186) target = $region16
      $region15: #{tpu_custom_call.1} parent=11 // pred_region
        _
      $region16: #{tpu_custom_call.1} parent=11 // pred_fallthru
        _
      // Predicated region
      $region17: #{tpu_custom_call.1} parent=11 // pred_check
        %p189 = pneg %p94
      $region18: #{tpu_custom_call.1} parent=11 // pred_check_branch
        %191 = sbr.rel (%p189) target = $region20
      $region19: #{tpu_custom_call.1} parent=11 // pred_region
        _
      $region20: #{tpu_custom_call.1} parent=11 // pred_fallthru
        _
      // Predicated region
      $region21: #{tpu_custom_call.1} parent=11 // pred_check
        %p192 = pneg %p115
      $region22: #{tpu_custom_call.1} parent=11 // pred_check_branch
        %194 = sbr.rel (%p192) target = $region24
      $region23: #{tpu_custom_call.1} parent=11 // pred_region
        _
      $region24: #{tpu_custom_call.1} parent=11 // pred_fallthru
        _
    $region12: #{tpu_custom_call.1} parent=5 // pred_fallthru
      _
    %p195 = scmp.lt.s32.totalorder %s12, 2
    // Predicated region
    $region25: #{tpu_custom_call.1} parent=5 // pred_check
      %p196 = pneg %p195
    $region26: #{tpu_custom_call.1} parent=5 // pred_check_branch
      %198 = sbr.rel (%p196) target = $region28
    $region27: #{tpu_custom_call.1} parent=5 // pred_region
      // Predicated region
      $region29: #{tpu_custom_call.1} parent=27 // pred_check
        %p199 = pneg %p46
      $region30: #{tpu_custom_call.1} parent=27 // pred_check_branch
        %201 = sbr.rel (%p199) target = $region32
      $region31: #{tpu_custom_call.1} parent=27 // pred_region
        %s202 = smul.u32 2, %s20
        %p203 = scmp.lt.s32.totalorder %s19, 1
        %s204 = scalar_select %p203, %s19, 1
        %p205 = scmp.lt.s32.totalorder %s202, 1
        %s206 = scalar_select %p205, %s202, 1
        %s207 = smul.addr %s204, 2
        %s208 = sadd.s32 %s206, %s207
        %s209 = smul.addr %s208, 4
        %s210 = scalar_lea.vmem %s0, %s209
        %s211 = smul.u32 2, %s20
      $region32: #{tpu_custom_call.1} parent=27 // pred_fallthru
        _
    $region28: #{tpu_custom_call.1} parent=5 // pred_fallthru
      _
    %p212 = scmp.le.s32.totalorder 1, %s12
    %p213 = scmp.lt.s32.totalorder %s12, 3
    %p214 = pnand %p212, %p213
    %p215 = pneg %p214
    // Predicated region
    $region33: #{tpu_custom_call.1} parent=5 // pred_check
      _
    $region34: #{tpu_custom_call.1} parent=5 // pred_check_branch
      %217 = sbr.rel (%p214) target = $region36
    $region35: #{tpu_custom_call.1} parent=5 // pred_region
      %s218 = ssub.s32 %s12, 1
      %s219 = smul.u32 2, %s22
      %p220 = scmp.lt.s32.totalorder %s21, 1
      %s221 = scalar_select %p220, %s21, 1
      %p222 = scmp.lt.s32.totalorder %s219, 1
      %s223 = scalar_select %p222, %s219, 1
      %s224 = smul.addr %s221, 2
      %s225 = sadd.s32 %s223, %s224
      %s226 = smul.addr %s225, 4
      %s227 = scalar_lea.vmem %s0, %s226
      %p228 = pneg %p52
      %p229 = pneg %p49
      %p230 = pneg %p73
      %p231 = pneg %p70
      %p232 = pneg %p94
      %p233 = pneg %p91
      %p234 = pneg %p115
      %p235 = pneg %p112
      %p236 = pneg %p143
      %p237 = pneg %p140
      %p238 = scmp.lt.s32.totalorder %s21, 1
      %s239 = scalar_select %p238, %s21, 1
      %p240 = scmp.lt.s32.totalorder %s22, 0
      %s241 = scalar_select %p240, %s22, 0
      %s242 = smul.addr %s241, 16
      %s243 = smul.addr %s239, 16
      %s244 = sadd.s32 %s242, %s243
      %s245 = smul.addr %s244, 8
      %s246 = scalar_lea.vmem %s4, %s245
      %p247 = pneg %p171
      %p248 = pneg %p168
      %p249 = scmp.lt.s32.totalorder %s21, 1
      %s250 = scalar_select %p249, %s21, 1
      %p251 = scmp.lt.s32.totalorder %s22, 0
      %s252 = scalar_select %p251, %s22, 0
      %s253 = smul.addr %s252, 16
      %s254 = smul.addr %s250, 16
      %s255 = sadd.s32 %s253, %s254
      %s256 = smul.addr %s255, 8
      %s257 = scalar_lea.vmem %s5, %s256
      %s258 = smul.u32 2, %s22
      %p259 = scmp.lt.s32.totalorder %s21, 1
      %s260 = scalar_select %p259, %s21, 1
      %p261 = scmp.lt.s32.totalorder %s258, 1
      %s262 = scalar_select %p261, %s258, 1
      %s263 = smul.addr %s260, 2
      %s264 = sadd.s32 %s262, %s263
      %s265 = smul.addr %s264, 4
      %s266 = scalar_lea.vmem %s0, %s265
      %s267 = smul.u32 2, %s22
      %p268 = scmp.lt.s32.totalorder %s21, 1
      %s269 = scalar_select %p268, %s21, 1
      %p270 = scmp.lt.s32.totalorder %s22, 0
      %s271 = scalar_select %p270, %s22, 0
      %s272 = smul.addr %s271, 16
      %s273 = smul.addr %s269, 16
      %s274 = sadd.s32 %s272, %s273
      %s275 = smul.addr %s274, 8
      %s276 = scalar_lea.vmem %s4, %s275
      %p277 = scmp.lt.s32.totalorder %s21, 1
      %s278 = scalar_select %p277, %s21, 1
      %p279 = scmp.lt.s32.totalorder %s22, 0
      %s280 = scalar_select %p279, %s22, 0
      %s281 = smul.addr %s280, 16
      %s282 = smul.addr %s278, 16
      %s283 = sadd.s32 %s281, %s282
      %s284 = smul.addr %s283, 8
      %s285 = scalar_lea.vmem %s5, %s284
      %v286 = vld [vmem:[%s1] sm:$0xff]
      %v287 = vld [vmem:[%s1 + $0x8] sm:$0xff]
      %v288 = vld [vmem:[%s1 + $0x10] sm:$0xff]
      %v289 = vld [vmem:[%s1 + $0x18] sm:$0xff]
      %v290 = vld [vmem:[%s1 + $0x20] sm:$0xff]
      %v291 = vld [vmem:[%s1 + $0x28] sm:$0xff]
      %v292 = vld [vmem:[%s1 + $0x30] sm:$0xff]
      %v293 = vld [vmem:[%s1 + $0x38] sm:$0xff]
      %v294 = vld [vmem:[%s266] sm:$0xff]
      %v295 = vld [vmem:[%s2] sm:$0xff]
      %v296 = vld [vmem:[%s2 + $0x8] sm:$0xff]
      %v297 = vld [vmem:[%s2 + $0x10] sm:$0xff]
      %v298 = vld [vmem:[%s2 + $0x18] sm:$0xff]
      %v299 = vld [vmem:[%s2 + $0x20] sm:$0xff]
      %v300 = vld [vmem:[%s2 + $0x28] sm:$0xff]
      %v301 = vld [vmem:[%s2 + $0x30] sm:$0xff]
      %v302 = vld [vmem:[%s2 + $0x38] sm:$0xff]
      %304 = vset.pattern.permute.xlu0 0
      %305 = vperm.xlu0 %304, %v295
      %v306 = vpop.permute.xlu0 %305
      %309 = vset.pattern.permute.xlu0 0
      %310 = vperm.xlu0 %309, %v296
      %v311 = vpop.permute.xlu0 %310
      %314 = vset.pattern.permute.xlu0 0
      %315 = vperm.xlu0 %314, %v297
      %v316 = vpop.permute.xlu0 %315
      %319 = vset.pattern.permute.xlu0 0
      %320 = vperm.xlu0 %319, %v298
      %v321 = vpop.permute.xlu0 %320
      %324 = vset.pattern.permute.xlu0 0
      %325 = vperm.xlu0 %324, %v299
      %v326 = vpop.permute.xlu0 %325
      %329 = vset.pattern.permute.xlu0 0
      %330 = vperm.xlu0 %329, %v300
      %v331 = vpop.permute.xlu0 %330
      %334 = vset.pattern.permute.xlu0 0
      %335 = vperm.xlu0 %334, %v301
      %v336 = vpop.permute.xlu0 %335
      %339 = vset.pattern.permute.xlu0 0
      %340 = vperm.xlu0 %339, %v302
      %v341 = vpop.permute.xlu0 %340
      %v344 = vcombine.high %v294, %v294
      %vm345 = vcmask 31744
      %v347 = vsel %vm345, %v286, 0
      %v350 = vsel %vm345, %v287, 0
      %v353 = vsel %vm345, %v288, 0
      %v356 = vsel %vm345, %v289, 0
      %v359 = vsel %vm345, %v290, 0
      %v362 = vsel %vm345, %v291, 0
      %v365 = vsel %vm345, %v292, 0
      %v368 = vsel %vm345, %v293, 0
      %vm370 = vcmask 1043456
      %v371 = vsel %vm370, %v294, 0
      %v373 = vsel %vm370, %v344, 0
      %375 = vmatprep.subr.mxu0 %v373
      %376 = vmatpush1.msra.mxu0 %v371
      %377 = vmatprep.subr.mxu0 0.0
      %378 = vmatpush1.msra.mxu0 0.0
      %379 = vmatprep.subr.mxu0 0.0
      %380 = vmatpush1.msra.mxu0 0.0
      %381 = vmatprep.subr.mxu0 0.0
      %382 = vmatpush1.msra.mxu0 0.0
      %383 = vmatprep.subr.mxu0 0.0
      %384 = vmatpush1.msra.mxu0 0.0
      %385 = vmatprep.subr.mxu0 0.0
      %386 = vmatpush1.msra.mxu0 0.0
      %387 = vmatprep.subr.mxu0 0.0
      %388 = vmatpush1.msra.mxu0 0.0
      %389 = vmatprep.subr.mxu0 0.0
      %390 = vmatpush1.msra.mxu0 0.0
      %391 = vmatprep.subr.mxu0 0.0
      %392 = vmatpush1.msra.mxu0 0.0
      %393 = vmatprep.subr.mxu0 0.0
      %394 = vmatpush1.msra.mxu0 0.0
      %395 = vmatprep.subr.mxu0 0.0
      %396 = vmatpush1.msra.mxu0 0.0
      %397 = vmatprep.subr.mxu0 0.0
      %398 = vmatpush1.msra.mxu0 0.0
      %399 = vmatprep.subr.mxu0 0.0
      %400 = vmatpush1.msra.mxu0 0.0
      %401 = vmatprep.subr.mxu0 0.0
      %402 = vmatpush1.msra.mxu0 0.0
      %403 = vmatprep.subr.mxu0 0.0
      %404 = vmatpush1.msra.mxu0 0.0
      %405 = vmatprep.subr.mxu0 0.0
      %406 = vmatpush1.msra.mxu0 0.0
      %407 = vmatprep.subr.mxu0 0.0
      %408 = vmatpush1.msra.mxu0 0.0
      %409 = vmatprep.subr.mxu0 0.0
      %410 = vmatpush1.msra.mxu0 0.0
      %411 = vmatprep.subr.mxu0 0.0
      %412 = vmatpush1.msra.mxu0 0.0
      %413 = vmatprep.subr.mxu0 0.0
      %414 = vmatpush1.msra.mxu0 0.0
      %415 = vmatprep.subr.mxu0 0.0
      %416 = vmatpush1.msra.mxu0 0.0
      %417 = vmatprep.subr.mxu0 0.0
      %418 = vmatpush1.msra.mxu0 0.0
      %419 = vmatprep.subr.mxu0 0.0
      %420 = vmatpush1.msra.mxu0 0.0
      %421 = vmatprep.subr.mxu0 0.0
      %422 = vmatpush1.msra.mxu0 0.0
      %423 = vmatprep.subr.mxu0 0.0
      %424 = vmatpush1.msra.mxu0 0.0
      %425 = vmatprep.subr.mxu0 0.0
      %426 = vmatpush1.msra.mxu0 0.0
      %427 = vmatprep.subr.mxu0 0.0
      %428 = vmatpush1.msra.mxu0 0.0
      %429 = vmatprep.subr.mxu0 0.0
      %430 = vmatpush1.msra.mxu0 0.0
      %431 = vmatprep.subr.mxu0 0.0
      %432 = vmatpush1.msra.mxu0 0.0
      %433 = vmatprep.subr.mxu0 0.0
      %434 = vmatpush1.msra.mxu0 0.0
      %435 = vmatprep.subr.mxu0 0.0
      %436 = vmatpush1.msra.mxu0 0.0
      %437 = vmatprep.subr.mxu0 0.0
      %438 = vmatpush1.msra.mxu0 0.0
      %439 = vmatprep.mubr.f32.mxu0 0.0
      %440 = vmatmul.mubr.f32.gmra.mrb[0].mxu0 %v347
      %v441 = vpop.f32.mrb[0].mxu0
      %v442 = vadd.f32 %v306, %v441
      %v443 = vpop.f32.mrb[0].mxu0
      %v444 = vadd.f32 %v306, %v443
      %445 = vmatprep.mubr.f32.mxu0 0.0
      %446 = vmatmul.mubr.f32.gmra.mrb[0].mxu0 %v350
      %v447 = vpop.f32.mrb[0].mxu0
      %v448 = vadd.f32 %v311, %v447
      %v449 = vpop.f32.mrb[0].mxu0
      %v450 = vadd.f32 %v311, %v449
      %451 = vmatprep.mubr.f32.mxu0 0.0
      %452 = vmatmul.mubr.f32.gmra.mrb[0].mxu0 %v353
      %v453 = vpop.f32.mrb[0].mxu0
      %v454 = vadd.f32 %v316, %v453
      %v455 = vpop.f32.mrb[0].mxu0
      %v456 = vadd.f32 %v316, %v455
      %457 = vmatprep.mubr.f32.mxu0 0.0
      %458 = vmatmul.mubr.f32.gmra.mrb[0].mxu0 %v356
      %v459 = vpop.f32.mrb[0].mxu0
      %v460 = vadd.f32 %v321, %v459
      %v461 = vpop.f32.mrb[0].mxu0
      %v462 = vadd.f32 %v321, %v461
      %463 = vmatprep.mubr.f32.mxu0 0.0
      %464 = vmatmul.mubr.f32.gmra.mrb[0].mxu0 %v359
      %v465 = vpop.f32.mrb[0].mxu0
      %v466 = vadd.f32 %v326, %v465
      %v467 = vpop.f32.mrb[0].mxu0
      %v468 = vadd.f32 %v326, %v467
      %469 = vmatprep.mubr.f32.mxu0 0.0
      %470 = vmatmul.mubr.f32.gmra.mrb[0].mxu0 %v362
      %v471 = vpop.f32.mrb[0].mxu0
      %v472 = vadd.f32 %v331, %v471
      %v473 = vpop.f32.mrb[0].mxu0
      %v474 = vadd.f32 %v331, %v473
      %475 = vmatprep.mubr.f32.mxu0 0.0
      %476 = vmatmul.mubr.f32.gmra.mrb[0].mxu0 %v365
      %v477 = vpop.f32.mrb[0].mxu0
      %v478 = vadd.f32 %v336, %v477
      %v479 = vpop.f32.mrb[0].mxu0
      %v480 = vadd.f32 %v336, %v479
      %481 = vmatprep.mubr.f32.mxu0 0.0
      %482 = vmatmul.mubr.f32.gmra.mrb[0].mxu0 %v368
      %v483 = vpop.f32.mrb[0].mxu0
      %v484 = vadd.f32 %v341, %v483
      %v485 = vpop.f32.mrb[0].mxu0
      %v486 = vadd.f32 %v341, %v485
      %487 = vdwg.mxu0
      %vm488 = vcmp.ge.f32.partialorder %v442, 0.0
      %vm489 = vcmp.ge.f32.partialorder %v444, 0.0
      %vm490 = vcmp.ge.f32.partialorder %v448, 0.0
      %vm491 = vcmp.ge.f32.partialorder %v450, 0.0
      %vm492 = vcmp.ge.f32.partialorder %v454, 0.0
      %vm493 = vcmp.ge.f32.partialorder %v456, 0.0
      %vm494 = vcmp.ge.f32.partialorder %v460, 0.0
      %vm495 = vcmp.ge.f32.partialorder %v462, 0.0
      %vm496 = vcmp.ge.f32.partialorder %v466, 0.0
      %vm497 = vcmp.ge.f32.partialorder %v468, 0.0
      %vm498 = vcmp.ge.f32.partialorder %v472, 0.0
      %vm499 = vcmp.ge.f32.partialorder %v474, 0.0
      %vm500 = vcmp.ge.f32.partialorder %v478, 0.0
      %vm501 = vcmp.ge.f32.partialorder %v480, 0.0
      %vm502 = vcmp.ge.f32.partialorder %v484, 0.0
      %vm503 = vcmp.ge.f32.partialorder %v486, 0.0
      %v504 = vmul.f32 %v442, 0.2
      %v505 = vmul.f32 %v444, 0.2
      %v506 = vmul.f32 %v448, 0.2
      %v507 = vmul.f32 %v450, 0.2
      %v508 = vmul.f32 %v454, 0.2
      %v509 = vmul.f32 %v456, 0.2
      %v510 = vmul.f32 %v460, 0.2
      %v511 = vmul.f32 %v462, 0.2
      %v512 = vmul.f32 %v466, 0.2
      %v513 = vmul.f32 %v468, 0.2
      %v514 = vmul.f32 %v472, 0.2
      %v515 = vmul.f32 %v474, 0.2
      %v516 = vmul.f32 %v478, 0.2
      %v517 = vmul.f32 %v480, 0.2
      %v518 = vmul.f32 %v484, 0.2
      %v519 = vmul.f32 %v486, 0.2
      %v520 = vsel %vm488, %v442, %v504
      %v521 = vsel %vm489, %v444, %v505
      %v522 = vsel %vm490, %v448, %v506
      %v523 = vsel %vm491, %v450, %v507
      %v524 = vsel %vm492, %v454, %v508
      %v525 = vsel %vm493, %v456, %v509
      %v526 = vsel %vm494, %v460, %v510
      %v527 = vsel %vm495, %v462, %v511
      %v528 = vsel %vm496, %v466, %v512
      %v529 = vsel %vm497, %v468, %v513
      %v530 = vsel %vm498, %v472, %v514
      %v531 = vsel %vm499, %v474, %v515
      %v532 = vsel %vm500, %v478, %v516
      %v533 = vsel %vm501, %v480, %v517
      %v534 = vsel %vm502, %v484, %v518
      %v535 = vsel %vm503, %v486, %v519
      %v536 = vld [vmem:[%s3] sm:$0xff]
      %v537 = vld [vmem:[%s3 + $0x8] sm:$0xff]
      %v538 = vld [vmem:[%s3 + $0x10] sm:$0xff]
      %v539 = vld [vmem:[%s3 + $0x18] sm:$0xff]
      %v540 = vld [vmem:[%s3 + $0x20] sm:$0xff]
      %v541 = vld [vmem:[%s3 + $0x28] sm:$0xff]
      %v542 = vld [vmem:[%s3 + $0x30] sm:$0xff]
      %v543 = vld [vmem:[%s3 + $0x38] sm:$0xff]
      %v544 = vld [vmem:[%s3 + $0x40] sm:$0xff]
      %v545 = vld [vmem:[%s3 + $0x48] sm:$0xff]
      %v546 = vld [vmem:[%s3 + $0x50] sm:$0xff]
      %v547 = vld [vmem:[%s3 + $0x58] sm:$0xff]
      %v548 = vld [vmem:[%s3 + $0x60] sm:$0xff]
      %v549 = vld [vmem:[%s3 + $0x68] sm:$0xff]
      %v550 = vld [vmem:[%s3 + $0x70] sm:$0xff]
      %v551 = vld [vmem:[%s3 + $0x78] sm:$0xff]
      %vm552 = vcmask 523264
      %v554 = vsel %vm552, %v536, 0
      %v557 = vsel %vm552, %v537, 0
      %v560 = vsel %vm552, %v538, 0
      %v563 = vsel %vm552, %v539, 0
      %v566 = vsel %vm552, %v540, 0
      %v569 = vsel %vm552, %v541, 0
      %v572 = vsel %vm552, %v542, 0
      %v575 = vsel %vm552, %v543, 0
      %v578 = vsel %vm552, %v544, 0
      %v581 = vsel %vm552, %v545, 0
      %v584 = vsel %vm552, %v546, 0
      %v587 = vsel %vm552, %v547, 0
      %v590 = vsel %vm552, %v548, 0
      %v593 = vsel %vm552, %v549, 0
      %v596 = vsel %vm552, %v550, 0
      %v599 = vsel %vm552, %v551, 0
      %601 = vmatprep.subr.mxu0 %v521
      %602 = vmatpush1.msra.mxu0 %v520
      %603 = vmatprep.subr.mxu0 %v523
      %604 = vmatpush1.msra.mxu0 %v522
      %605 = vmatprep.subr.mxu0 %v525
      %606 = vmatpush1.msra.mxu0 %v524
      %607 = vmatprep.subr.mxu0 %v527
      %608 = vmatpush1.msra.mxu0 %v526
      %609 = vmatprep.subr.mxu0 %v529
      %610 = vmatpush1.msra.mxu0 %v528
      %611 = vmatprep.subr.mxu0 %v531
      %612 = vmatpush1.msra.mxu0 %v530
      %613 = vmatprep.subr.mxu0 %v533
      %614 = vmatpush1.msra.mxu0 %v532
      %615 = vmatprep.subr.mxu0 %v535
      %616 = vmatpush1.msra.mxu0 %v534
      %617 = vmatprep.subr.mxu0 0.0
      %618 = vmatpush1.msra.mxu0 0.0
      %619 = vmatprep.subr.mxu0 0.0
      %620 = vmatpush1.msra.mxu0 0.0
      %621 = vmatprep.subr.mxu0 0.0
      %622 = vmatpush1.msra.mxu0 0.0
      %623 = vmatprep.subr.mxu0 0.0
      %624 = vmatpush1.msra.mxu0 0.0
      %625 = vmatprep.subr.mxu0 0.0
      %626 = vmatpush1.msra.mxu0 0.0
      %627 = vmatprep.subr.mxu0 0.0
      %628 = vmatpush1.msra.mxu0 0.0
      %629 = vmatprep.subr.mxu0 0.0
      %630 = vmatpush1.msra.mxu0 0.0
      %631 = vmatprep.subr.mxu0 0.0
      %632 = vmatpush1.msra.mxu0 0.0
      %633 = vmatprep.subr.mxu0 0.0
      %634 = vmatpush1.msra.mxu0 0.0
      %635 = vmatprep.subr.mxu0 0.0
      %636 = vmatpush1.msra.mxu0 0.0
      %637 = vmatprep.subr.mxu0 0.0
      %638 = vmatpush1.msra.mxu0 0.0
      %639 = vmatprep.subr.mxu0 0.0
      %640 = vmatpush1.msra.mxu0 0.0
      %641 = vmatprep.subr.mxu0 0.0
      %642 = vmatpush1.msra.mxu0 0.0
      %643 = vmatprep.subr.mxu0 0.0
      %644 = vmatpush1.msra.mxu0 0.0
      %645 = vmatprep.subr.mxu0 0.0
      %646 = vmatpush1.msra.mxu0 0.0
      %647 = vmatprep.subr.mxu0 0.0
      %648 = vmatpush1.msra.mxu0 0.0
      %649 = vmatprep.subr.mxu0 0.0
      %650 = vmatpush1.msra.mxu0 0.0
      %651 = vmatprep.subr.mxu0 0.0
      %652 = vmatpush1.msra.mxu0 0.0
      %653 = vmatprep.subr.mxu0 0.0
      %654 = vmatpush1.msra.mxu0 0.0
      %655 = vmatprep.subr.mxu0 0.0
      %656 = vmatpush1.msra.mxu0 0.0
      %657 = vmatprep.subr.mxu0 0.0
      %658 = vmatpush1.msra.mxu0 0.0
      %659 = vmatprep.subr.mxu0 0.0
      %660 = vmatpush1.msra.mxu0 0.0
      %661 = vmatprep.subr.mxu0 0.0
      %662 = vmatpush1.msra.mxu0 0.0
      %663 = vmatprep.subr.mxu0 0.0
      %664 = vmatpush1.msra.mxu0 0.0
      %665 = vmatprep.mubr.f32.mxu0 0.0
      %666 = vmatmul.mubr.f32.gmra.mrb[0].mxu0 %v554
      %v667 = vpop.f32.mrb[0].mxu0
      %v668 = vadd.f32 0.0, %v667
      %v669 = vpop.f32.mrb[0].mxu0
      %v670 = vadd.f32 0.0, %v669
      %671 = vmatprep.mubr.f32.mxu0 0.0
      %672 = vmatmul.mubr.f32.gmra.mrb[0].mxu0 %v557
      %v673 = vpop.f32.mrb[0].mxu0
      %v674 = vadd.f32 0.0, %v673
      %v675 = vpop.f32.mrb[0].mxu0
      %v676 = vadd.f32 0.0, %v675
      %677 = vmatprep.mubr.f32.mxu0 0.0
      %678 = vmatmul.mubr.f32.gmra.mrb[0].mxu0 %v560
      %v679 = vpop.f32.mrb[0].mxu0
      %v680 = vadd.f32 0.0, %v679
      %v681 = vpop.f32.mrb[0].mxu0
      %v682 = vadd.f32 0.0, %v681
      %683 = vmatprep.mubr.f32.mxu0 0.0
      %684 = vmatmul.mubr.f32.gmra.mrb[0].mxu0 %v563
      %v685 = vpop.f32.mrb[0].mxu0
      %v686 = vadd.f32 0.0, %v685
      %v687 = vpop.f32.mrb[0].mxu0
      %v688 = vadd.f32 0.0, %v687
      %689 = vmatprep.mubr.f32.mxu0 0.0
      %690 = vmatmul.mubr.f32.gmra.mrb[0].mxu0 %v566
      %v691 = vpop.f32.mrb[0].mxu0
      %v692 = vadd.f32 0.0, %v691
      %v693 = vpop.f32.mrb[0].mxu0
      %v694 = vadd.f32 0.0, %v693
      %695 = vmatprep.mubr.f32.mxu0 0.0
      %696 = vmatmul.mubr.f32.gmra.mrb[0].mxu0 %v569
      %v697 = vpop.f32.mrb[0].mxu0
      %v698 = vadd.f32 0.0, %v697
      %v699 = vpop.f32.mrb[0].mxu0
      %v700 = vadd.f32 0.0, %v699
      %701 = vmatprep.mubr.f32.mxu0 0.0
      %702 = vmatmul.mubr.f32.gmra.mrb[0].mxu0 %v572
      %v703 = vpop.f32.mrb[0].mxu0
      %v704 = vadd.f32 0.0, %v703
      %v705 = vpop.f32.mrb[0].mxu0
      %v706 = vadd.f32 0.0, %v705
      %707 = vmatprep.mubr.f32.mxu0 0.0
      %708 = vmatmul.mubr.f32.gmra.mrb[0].mxu0 %v575
      %v709 = vpop.f32.mrb[0].mxu0
      %v710 = vadd.f32 0.0, %v709
      %v711 = vpop.f32.mrb[0].mxu0
      %v712 = vadd.f32 0.0, %v711
      %713 = vmatprep.mubr.f32.mxu0 0.0
      %714 = vmatmul.mubr.f32.gmra.mrb[0].mxu0 %v578
      %v715 = vpop.f32.mrb[0].mxu0
      %v716 = vadd.f32 0.0, %v715
      %v717 = vpop.f32.mrb[0].mxu0
      %v718 = vadd.f32 0.0, %v717
      %719 = vmatprep.mubr.f32.mxu0 0.0
      %720 = vmatmul.mubr.f32.gmra.mrb[0].mxu0 %v581
      %v721 = vpop.f32.mrb[0].mxu0
      %v722 = vadd.f32 0.0, %v721
      %v723 = vpop.f32.mrb[0].mxu0
      %v724 = vadd.f32 0.0, %v723
      %725 = vmatprep.mubr.f32.mxu0 0.0
      %726 = vmatmul.mubr.f32.gmra.mrb[0].mxu0 %v584
      %v727 = vpop.f32.mrb[0].mxu0
      %v728 = vadd.f32 0.0, %v727
      %v729 = vpop.f32.mrb[0].mxu0
      %v730 = vadd.f32 0.0, %v729
      %731 = vmatprep.mubr.f32.mxu0 0.0
      %732 = vmatmul.mubr.f32.gmra.mrb[0].mxu0 %v587
      %v733 = vpop.f32.mrb[0].mxu0
      %v734 = vadd.f32 0.0, %v733
      %v735 = vpop.f32.mrb[0].mxu0
      %v736 = vadd.f32 0.0, %v735
      %737 = vmatprep.mubr.f32.mxu0 0.0
      %738 = vmatmul.mubr.f32.gmra.mrb[0].mxu0 %v590
      %v739 = vpop.f32.mrb[0].mxu0
      %v740 = vadd.f32 0.0, %v739
      %v741 = vpop.f32.mrb[0].mxu0
      %v742 = vadd.f32 0.0, %v741
      %743 = vmatprep.mubr.f32.mxu0 0.0
      %744 = vmatmul.mubr.f32.gmra.mrb[0].mxu0 %v593
      %v745 = vpop.f32.mrb[0].mxu0
      %v746 = vadd.f32 0.0, %v745
      %v747 = vpop.f32.mrb[0].mxu0
      %v748 = vadd.f32 0.0, %v747
      %749 = vmatprep.mubr.f32.mxu0 0.0
      %750 = vmatmul.mubr.f32.gmra.mrb[0].mxu0 %v596
      %v751 = vpop.f32.mrb[0].mxu0
      %v752 = vadd.f32 0.0, %v751
      %v753 = vpop.f32.mrb[0].mxu0
      %v754 = vadd.f32 0.0, %v753
      %755 = vmatprep.mubr.f32.mxu0 0.0
      %756 = vmatmul.mubr.f32.gmra.mrb[0].mxu0 %v599
      %v757 = vpop.f32.mrb[0].mxu0
      %v758 = vadd.f32 0.0, %v757
      %v759 = vpop.f32.mrb[0].mxu0
      %v760 = vadd.f32 0.0, %v759
      %761 = vdwg.mxu0
      %v762 = vlaneseq
      %v763 = vand.u32 %v762, 127
      %v764 = vadd.s32 %v763, 128
      %s765 = smul.u32 %s22, 256
      %v766 = vstv %s765
      %v767 = vadd.s32 %v766, %v763
      %v768 = vadd.s32 %v766, %v764
      %vm769 = vcmp.lt.s32.totalorder %v767, 256
      %vm770 = vcmp.lt.s32.totalorder %v768, 256
      %s771 = ssub.s32 256, %s765
      %p772 = scmp.lt.s32.totalorder %s771, 256
      %s773 = scalar_select %p772, %s771, 256
      %s774 = scvt.s32.f32 %s773
      %v775 = vsel %vm769, 1, 0
      %v776 = vsel %vm770, 1, 0
      %vm777 = vcmp.eq.s32.totalorder %v775, 1
      %vm778 = vcmp.eq.s32.totalorder %v776, 1
      %v779 = vsel %vm777, %v668, 0.0
      %v780 = vsel %vm778, %v670, 0.0
      %v781 = vsel %vm777, %v674, 0.0
      %v782 = vsel %vm778, %v676, 0.0
      %v783 = vsel %vm777, %v680, 0.0
      %v784 = vsel %vm778, %v682, 0.0
      %v785 = vsel %vm777, %v686, 0.0
      %v786 = vsel %vm778, %v688, 0.0
      %v787 = vsel %vm777, %v692, 0.0
      %v788 = vsel %vm778, %v694, 0.0
      %v789 = vsel %vm777, %v698, 0.0
      %v790 = vsel %vm778, %v700, 0.0
      %v791 = vsel %vm777, %v704, 0.0
      %v792 = vsel %vm778, %v706, 0.0
      %v793 = vsel %vm777, %v710, 0.0
      %v794 = vsel %vm778, %v712, 0.0
      %v795 = vsel %vm777, %v716, 0.0
      %v796 = vsel %vm778, %v718, 0.0
      %v797 = vsel %vm777, %v722, 0.0
      %v798 = vsel %vm778, %v724, 0.0
      %v799 = vsel %vm777, %v728, 0.0
      %v800 = vsel %vm778, %v730, 0.0
      %v801 = vsel %vm777, %v734, 0.0
      %v802 = vsel %vm778, %v736, 0.0
      %v803 = vsel %vm777, %v740, 0.0
      %v804 = vsel %vm778, %v742, 0.0
      %v805 = vsel %vm777, %v746, 0.0
      %v806 = vsel %vm778, %v748, 0.0
      %v807 = vsel %vm777, %v752, 0.0
      %v808 = vsel %vm778, %v754, 0.0
      %v809 = vsel %vm777, %v758, 0.0
      %v810 = vsel %vm778, %v760, 0.0
      %v811 = vadd.f32 %v779, %v780
      %812 = vadd.xlane.f32.xlu0 %v811
      %v813 = vpop.xlane.xlu0 %812
      %v814 = vadd.f32 %v781, %v782
      %815 = vadd.xlane.f32.xlu0 %v814
      %v816 = vpop.xlane.xlu0 %815
      %v817 = vadd.f32 %v783, %v784
      %818 = vadd.xlane.f32.xlu0 %v817
      %v819 = vpop.xlane.xlu0 %818
      %v820 = vadd.f32 %v785, %v786
      %821 = vadd.xlane.f32.xlu0 %v820
      %v822 = vpop.xlane.xlu0 %821
      %v823 = vadd.f32 %v787, %v788
      %824 = vadd.xlane.f32.xlu0 %v823
      %v825 = vpop.xlane.xlu0 %824
      %v826 = vadd.f32 %v789, %v790
      %827 = vadd.xlane.f32.xlu0 %v826
      %v828 = vpop.xlane.xlu0 %827
      %v829 = vadd.f32 %v791, %v792
      %830 = vadd.xlane.f32.xlu0 %v829
      %v831 = vpop.xlane.xlu0 %830
      %v832 = vadd.f32 %v793, %v794
      %833 = vadd.xlane.f32.xlu0 %v832
      %v834 = vpop.xlane.xlu0 %833
      %v835 = vadd.f32 %v795, %v796
      %836 = vadd.xlane.f32.xlu0 %v835
      %v837 = vpop.xlane.xlu0 %836
      %v838 = vadd.f32 %v797, %v798
      %839 = vadd.xlane.f32.xlu0 %v838
      %v840 = vpop.xlane.xlu0 %839
      %v841 = vadd.f32 %v799, %v800
      %842 = vadd.xlane.f32.xlu0 %v841
      %v843 = vpop.xlane.xlu0 %842
      %v844 = vadd.f32 %v801, %v802
      %845 = vadd.xlane.f32.xlu0 %v844
      %v846 = vpop.xlane.xlu0 %845
      %v847 = vadd.f32 %v803, %v804
      %848 = vadd.xlane.f32.xlu0 %v847
      %v849 = vpop.xlane.xlu0 %848
      %v850 = vadd.f32 %v805, %v806
      %851 = vadd.xlane.f32.xlu0 %v850
      %v852 = vpop.xlane.xlu0 %851
      %v853 = vadd.f32 %v807, %v808
      %854 = vadd.xlane.f32.xlu0 %v853
      %v855 = vpop.xlane.xlu0 %854
      %v856 = vadd.f32 %v809, %v810
      %857 = vadd.xlane.f32.xlu0 %v856
      %v858 = vpop.xlane.xlu0 %857
      %v859 = vstv %s774
      %v860 = vrcp.pop %v859
      %v861 = vmul.f32 %v813, %v860
      %v862 = vmul.f32 %v816, %v860
      %v863 = vmul.f32 %v819, %v860
      %v864 = vmul.f32 %v822, %v860
      %v865 = vmul.f32 %v825, %v860
      %v866 = vmul.f32 %v828, %v860
      %v867 = vmul.f32 %v831, %v860
      %v868 = vmul.f32 %v834, %v860
      %v869 = vmul.f32 %v837, %v860
      %v870 = vmul.f32 %v840, %v860
      %v871 = vmul.f32 %v843, %v860
      %v872 = vmul.f32 %v846, %v860
      %v873 = vmul.f32 %v849, %v860
      %v874 = vmul.f32 %v852, %v860
      %v875 = vmul.f32 %v855, %v860
      %v876 = vmul.f32 %v858, %v860
      %v877 = vsub.f32 %v668, %v861
      %v878 = vsub.f32 %v670, %v861
      %v879 = vsub.f32 %v674, %v862
      %v880 = vsub.f32 %v676, %v862
      %v881 = vsub.f32 %v680, %v863
      %v882 = vsub.f32 %v682, %v863
      %v883 = vsub.f32 %v686, %v864
      %v884 = vsub.f32 %v688, %v864
      %v885 = vsub.f32 %v692, %v865
      %v886 = vsub.f32 %v694, %v865
      %v887 = vsub.f32 %v698, %v866
      %v888 = vsub.f32 %v700, %v866
      %v889 = vsub.f32 %v704, %v867
      %v890 = vsub.f32 %v706, %v867
      %v891 = vsub.f32 %v710, %v868
      %v892 = vsub.f32 %v712, %v868
      %v893 = vsub.f32 %v716, %v869
      %v894 = vsub.f32 %v718, %v869
      %v895 = vsub.f32 %v722, %v870
      %v896 = vsub.f32 %v724, %v870
      %v897 = vsub.f32 %v728, %v871
      %v898 = vsub.f32 %v730, %v871
      %v899 = vsub.f32 %v734, %v872
      %v900 = vsub.f32 %v736, %v872
      %v901 = vsub.f32 %v740, %v873
      %v902 = vsub.f32 %v742, %v873
      %v903 = vsub.f32 %v746, %v874
      %v904 = vsub.f32 %v748, %v874
      %v905 = vsub.f32 %v752, %v875
      %v906 = vsub.f32 %v754, %v875
      %v907 = vsub.f32 %v758, %v876
      %v908 = vsub.f32 %v760, %v876
      %v909 = vsel %vm777, %v877, 0.0
      %v910 = vsel %vm778, %v878, 0.0
      %v911 = vsel %vm777, %v879, 0.0
      %v912 = vsel %vm778, %v880, 0.0
      %v913 = vsel %vm777, %v881, 0.0
      %v914 = vsel %vm778, %v882, 0.0
      %v915 = vsel %vm777, %v883, 0.0
      %v916 = vsel %vm778, %v884, 0.0
      %v917 = vsel %vm777, %v885, 0.0
      %v918 = vsel %vm778, %v886, 0.0
      %v919 = vsel %vm777, %v887, 0.0
      %v920 = vsel %vm778, %v888, 0.0
      %v921 = vsel %vm777, %v889, 0.0
      %v922 = vsel %vm778, %v890, 0.0
      %v923 = vsel %vm777, %v891, 0.0
      %v924 = vsel %vm778, %v892, 0.0
      %v925 = vsel %vm777, %v893, 0.0
      %v926 = vsel %vm778, %v894, 0.0
      %v927 = vsel %vm777, %v895, 0.0
      %v928 = vsel %vm778, %v896, 0.0
      %v929 = vsel %vm777, %v897, 0.0
      %v930 = vsel %vm778, %v898, 0.0
      %v931 = vsel %vm777, %v899, 0.0
      %v932 = vsel %vm778, %v900, 0.0
      %v933 = vsel %vm777, %v901, 0.0
      %v934 = vsel %vm778, %v902, 0.0
      %v935 = vsel %vm777, %v903, 0.0
      %v936 = vsel %vm778, %v904, 0.0
      %v937 = vsel %vm777, %v905, 0.0
      %v938 = vsel %vm778, %v906, 0.0
      %v939 = vsel %vm777, %v907, 0.0
      %v940 = vsel %vm778, %v908, 0.0
      %vm941 = vcmask 7168
      %942 = vst.msk [vmem:[%s276] sm:$0xff] %vm941, %v813
      %943 = vst.msk [vmem:[%s276 + $0x8] sm:$0xff] %vm941, %v816
      %944 = vst.msk [vmem:[%s276 + $0x10] sm:$0xff] %vm941, %v819
      %945 = vst.msk [vmem:[%s276 + $0x18] sm:$0xff] %vm941, %v822
      %946 = vst.msk [vmem:[%s276 + $0x20] sm:$0xff] %vm941, %v825
      %947 = vst.msk [vmem:[%s276 + $0x28] sm:$0xff] %vm941, %v828
      %948 = vst.msk [vmem:[%s276 + $0x30] sm:$0xff] %vm941, %v831
      %949 = vst.msk [vmem:[%s276 + $0x38] sm:$0xff] %vm941, %v834
      %950 = vst.msk [vmem:[%s276 + $0x40] sm:$0xff] %vm941, %v837
      %951 = vst.msk [vmem:[%s276 + $0x48] sm:$0xff] %vm941, %v840
      %952 = vst.msk [vmem:[%s276 + $0x50] sm:$0xff] %vm941, %v843
      %953 = vst.msk [vmem:[%s276 + $0x58] sm:$0xff] %vm941, %v846
      %954 = vst.msk [vmem:[%s276 + $0x60] sm:$0xff] %vm941, %v849
      %955 = vst.msk [vmem:[%s276 + $0x68] sm:$0xff] %vm941, %v852
      %956 = vst.msk [vmem:[%s276 + $0x70] sm:$0xff] %vm941, %v855
      %957 = vst.msk [vmem:[%s276 + $0x78] sm:$0xff] %vm941, %v858
      %v958 = vmul.f32 %v909, %v909
      %v959 = vmul.f32 %v910, %v910
      %v960 = vmul.f32 %v911, %v911
      %v961 = vmul.f32 %v912, %v912
      %v962 = vmul.f32 %v913, %v913
      %v963 = vmul.f32 %v914, %v914
      %v964 = vmul.f32 %v915, %v915
      %v965 = vmul.f32 %v916, %v916
      %v966 = vmul.f32 %v917, %v917
      %v967 = vmul.f32 %v918, %v918
      %v968 = vmul.f32 %v919, %v919
      %v969 = vmul.f32 %v920, %v920
      %v970 = vmul.f32 %v921, %v921
      %v971 = vmul.f32 %v922, %v922
      %v972 = vmul.f32 %v923, %v923
      %v973 = vmul.f32 %v924, %v924
      %v974 = vmul.f32 %v925, %v925
      %v975 = vmul.f32 %v926, %v926
      %v976 = vmul.f32 %v927, %v927
      %v977 = vmul.f32 %v928, %v928
      %v978 = vmul.f32 %v929, %v929
      %v979 = vmul.f32 %v930, %v930
      %v980 = vmul.f32 %v931, %v931
      %v981 = vmul.f32 %v932, %v932
      %v982 = vmul.f32 %v933, %v933
      %v983 = vmul.f32 %v934, %v934
      %v984 = vmul.f32 %v935, %v935
      %v985 = vmul.f32 %v936, %v936
      %v986 = vmul.f32 %v937, %v937
      %v987 = vmul.f32 %v938, %v938
      %v988 = vmul.f32 %v939, %v939
      %v989 = vmul.f32 %v940, %v940
      %v990 = vadd.f32 %v958, %v959
      %991 = vadd.xlane.f32.xlu0 %v990
      %v992 = vpop.xlane.xlu0 %991
      %v993 = vadd.f32 %v960, %v961
      %994 = vadd.xlane.f32.xlu0 %v993
      %v995 = vpop.xlane.xlu0 %994
      %v996 = vadd.f32 %v962, %v963
      %997 = vadd.xlane.f32.xlu0 %v996
      %v998 = vpop.xlane.xlu0 %997
      %v999 = vadd.f32 %v964, %v965
      %1000 = vadd.xlane.f32.xlu0 %v999
      %v1001 = vpop.xlane.xlu0 %1000
      %v1002 = vadd.f32 %v966, %v967
      %1003 = vadd.xlane.f32.xlu0 %v1002
      %v1004 = vpop.xlane.xlu0 %1003
      %v1005 = vadd.f32 %v968, %v969
      %1006 = vadd.xlane.f32.xlu0 %v1005
      %v1007 = vpop.xlane.xlu0 %1006
      %v1008 = vadd.f32 %v970, %v971
      %1009 = vadd.xlane.f32.xlu0 %v1008
      %v1010 = vpop.xlane.xlu0 %1009
      %v1011 = vadd.f32 %v972, %v973
      %1012 = vadd.xlane.f32.xlu0 %v1011
      %v1013 = vpop.xlane.xlu0 %1012
      %v1014 = vadd.f32 %v974, %v975
      %1015 = vadd.xlane.f32.xlu0 %v1014
      %v1016 = vpop.xlane.xlu0 %1015
      %v1017 = vadd.f32 %v976, %v977
      %1018 = vadd.xlane.f32.xlu0 %v1017
      %v1019 = vpop.xlane.xlu0 %1018
      %v1020 = vadd.f32 %v978, %v979
      %1021 = vadd.xlane.f32.xlu0 %v1020
      %v1022 = vpop.xlane.xlu0 %1021
      %v1023 = vadd.f32 %v980, %v981
      %1024 = vadd.xlane.f32.xlu0 %v1023
      %v1025 = vpop.xlane.xlu0 %1024
      %v1026 = vadd.f32 %v982, %v983
      %1027 = vadd.xlane.f32.xlu0 %v1026
      %v1028 = vpop.xlane.xlu0 %1027
      %v1029 = vadd.f32 %v984, %v985
      %1030 = vadd.xlane.f32.xlu0 %v1029
      %v1031 = vpop.xlane.xlu0 %1030
      %v1032 = vadd.f32 %v986, %v987
      %1033 = vadd.xlane.f32.xlu0 %v1032
      %v1034 = vpop.xlane.xlu0 %1033
      %v1035 = vadd.f32 %v988, %v989
      %1036 = vadd.xlane.f32.xlu0 %v1035
      %v1037 = vpop.xlane.xlu0 %1036
      %1038 = vst.msk [vmem:[%s285] sm:$0xff] %vm941, %v992
      %1039 = vst.msk [vmem:[%s285 + $0x8] sm:$0xff] %vm941, %v995
      %1040 = vst.msk [vmem:[%s285 + $0x10] sm:$0xff] %vm941, %v998
      %1041 = vst.msk [vmem:[%s285 + $0x18] sm:$0xff] %vm941, %v1001
      %1042 = vst.msk [vmem:[%s285 + $0x20] sm:$0xff] %vm941, %v1004
      %1043 = vst.msk [vmem:[%s285 + $0x28] sm:$0xff] %vm941, %v1007
      %1044 = vst.msk [vmem:[%s285 + $0x30] sm:$0xff] %vm941, %v1010
      %1045 = vst.msk [vmem:[%s285 + $0x38] sm:$0xff] %vm941, %v1013
      %1046 = vst.msk [vmem:[%s285 + $0x40] sm:$0xff] %vm941, %v1016
      %1047 = vst.msk [vmem:[%s285 + $0x48] sm:$0xff] %vm941, %v1019
      %1048 = vst.msk [vmem:[%s285 + $0x50] sm:$0xff] %vm941, %v1022
      %1049 = vst.msk [vmem:[%s285 + $0x58] sm:$0xff] %vm941, %v1025
      %1050 = vst.msk [vmem:[%s285 + $0x60] sm:$0xff] %vm941, %v1028
      %1051 = vst.msk [vmem:[%s285 + $0x68] sm:$0xff] %vm941, %v1031
      %1052 = vst.msk [vmem:[%s285 + $0x70] sm:$0xff] %vm941, %v1034
      %1053 = vst.msk [vmem:[%s285 + $0x78] sm:$0xff] %vm941, %v1037
      %p1054 = scmp.lt.s32.totalorder %s21, 1
      %s1055 = scalar_select %p1054, %s21, 1
      %p1056 = scmp.lt.s32.totalorder %s22, 0
      %s1057 = scalar_select %p1056, %s22, 0
      %s1058 = smul.addr %s1057, 16
      %s1059 = smul.addr %s1055, 16
      %s1060 = sadd.s32 %s1058, %s1059
      %s1061 = smul.addr %s1060, 8
      %s1062 = scalar_lea.vmem %s4, %s1061
      %p1063 = scmp.lt.s32.totalorder %s21, 1
      %s1064 = scalar_select %p1063, %s21, 1
      %p1065 = scmp.lt.s32.totalorder %s22, 0
      %s1066 = scalar_select %p1065, %s22, 0
      %s1067 = smul.addr %s1066, 16
      %s1068 = smul.addr %s1064, 16
      %s1069 = sadd.s32 %s1067, %s1068
      %s1070 = smul.addr %s1069, 8
      %s1071 = scalar_lea.vmem %s5, %s1070
      // Predicated region
      $region37: #{tpu_custom_call.1} parent=35 // pred_check
        %p1072 = pneg %p140
      $region38: #{tpu_custom_call.1} parent=35 // pred_check_branch
        %1074 = sbr.rel (%p1072) target = $region40
      $region39: #{tpu_custom_call.1} parent=35 // pred_region
        _
      $region40: #{tpu_custom_call.1} parent=35 // pred_fallthru
        _
      // Predicated region
      $region41: #{tpu_custom_call.1} parent=35 // pred_check
        %p1075 = pneg %p168
      $region42: #{tpu_custom_call.1} parent=35 // pred_check_branch
        %1077 = sbr.rel (%p1075) target = $region44
      $region43: #{tpu_custom_call.1} parent=35 // pred_region
        _
      $region44: #{tpu_custom_call.1} parent=35 // pred_fallthru
        _
    $region36: #{tpu_custom_call.1} parent=5 // pred_fallthru
      _
    %p1078 = scmp.le.s32.totalorder 2, %s12
    // Predicated region
    $region45: #{tpu_custom_call.1} parent=5 // pred_check
      %p1079 = pneg %p1078
    $region46: #{tpu_custom_call.1} parent=5 // pred_check_branch
      %1081 = sbr.rel (%p1079) target = $region48
    $region47: #{tpu_custom_call.1} parent=5 // pred_region
      %s1082 = ssub.s32 %s12, 2
      // Predicated region
      $region49: #{tpu_custom_call.1} parent=47 // pred_check
        %p1083 = pneg %p146
      $region50: #{tpu_custom_call.1} parent=47 // pred_check_branch
        %1085 = sbr.rel (%p1083) target = $region52
      $region51: #{tpu_custom_call.1} parent=47 // pred_region
        %p1086 = scmp.lt.s32.totalorder %s23, 1
        %s1087 = scalar_select %p1086, %s23, 1
        %p1088 = scmp.lt.s32.totalorder %s24, 0
        %s1089 = scalar_select %p1088, %s24, 0
        %s1090 = smul.addr %s1089, 16
        %s1091 = smul.addr %s1087, 16
        %s1092 = sadd.s32 %s1090, %s1091
        %s1093 = smul.addr %s1092, 8
        %s1094 = scalar_lea.vmem %s4, %s1093
      $region52: #{tpu_custom_call.1} parent=47 // pred_fallthru
        _
      // Predicated region
      $region53: #{tpu_custom_call.1} parent=47 // pred_check
        %p1095 = pneg %p174
      $region54: #{tpu_custom_call.1} parent=47 // pred_check_branch
        %1097 = sbr.rel (%p1095) target = $region56
      $region55: #{tpu_custom_call.1} parent=47 // pred_region
        %p1098 = scmp.lt.s32.totalorder %s23, 1
        %s1099 = scalar_select %p1098, %s23, 1
        %p1100 = scmp.lt.s32.totalorder %s24, 0
        %s1101 = scalar_select %p1100, %s24, 0
        %s1102 = smul.addr %s1101, 16
        %s1103 = smul.addr %s1099, 16
        %s1104 = sadd.s32 %s1102, %s1103
        %s1105 = smul.addr %s1104, 8
        %s1106 = scalar_lea.vmem %s5, %s1105
      $region56: #{tpu_custom_call.1} parent=47 // pred_fallthru
        _
    $region48: #{tpu_custom_call.1} parent=5 // pred_fallthru
      _
  $region6: #{tpu_custom_call.1} parent=0 // loop_footer
    %s16 = sadd.s32 1, %s12
  $region7: #{tpu_custom_call.1} parent=0 // loop_footer_branch
    %11 = sbr.rel target = $region3
  $region8: #{tpu_custom_call.1} parent=0 // loop_exit
    _

</llo_original>
